<compile_context>
chip_gen: v6e
topology: v6e:2x2x1
jax: 0.10.0
libtpu: 0.0.40
codegen_flags: <defaults>
</compile_context>

<pallas_src>
import functools
import math

import jax
import jax.numpy as jnp
from jax import lax
from jax.experimental import pallas as pl
from jax.experimental.pallas import tpu as pltpu


def _gelu(x, use_tanh):
    if use_tanh:
        # tanh form: the transcendental goes to the EUP slot, off the VALU.
        c = 0.7978845608028654  # sqrt(2/pi)
        return 0.5 * x * (1.0 + jnp.tanh(c * (x + 0.044715 * x * x * x)))
    # Exact erf form: matches PyTorch F.gelu default semantics.
    return 0.5 * x * (1.0 + lax.erf(x * 0.7071067811865476))


def _mlp_kernel(ft_ref, w1_ref, b1_ref, w2_ref, b2_ref, o_ref,
                *, hidden, chunk_n, num_chunks, use_tanh_gelu):
    # ft_ref/o_ref: (2, tile_n)  row 0 = real, row 1 = imag   (lane-dense)
    # w1_ref: (hidden, 2)  b1_ref: (hidden, 1)  w2_ref: (2, hidden)  b2_ref: (2, 1)

    # Hoist weight loads and bias broadcasts out of the chunk loop
    # (JAX does not CSE broadcast_in_dim across unrolled iterations).
    w1c0 = w1_ref[:, 0:1]                                     # (hidden, 1)
    w1c1 = w1_ref[:, 1:2]                                     # (hidden, 1)
    w2 = w2_ref[...]                                          # (2, hidden)
    b1_b = jnp.broadcast_to(b1_ref[...], (hidden, chunk_n))   # (hidden, chunk_n)
    b2_b = jnp.broadcast_to(b2_ref[...], (2, chunk_n))        # (2, chunk_n)

    def body(c, carry):
        start = pl.multiple_of(c * chunk_n, chunk_n)
        ft = ft_ref[:, pl.ds(start, chunk_n)]                 # (2, chunk_n)
        # fc1: K=2 contraction -> VPU broadcast-FMA (keeps the MXU slot free).
        h = w1c0 * ft[0:1, :] + w1c1 * ft[1:2, :] + b1_b      # (hidden, chunk_n)
        h = _gelu(h, use_tanh_gelu)
        # fc2: (2, hidden) x (hidden, chunk_n); MXU is otherwise idle, f32 exact.
        o = jnp.dot(w2, h, preferred_element_type=jnp.float32) + b2_b
        o_ref[:, pl.ds(start, chunk_n)] = o.astype(o_ref.dtype)
        return carry

    # Unrolled: static trip count, bounds the (hidden, chunk_n) live range.
    lax.fori_loop(0, num_chunks, body, 0, unroll=True)


def afno_block_forward(x, w1, b1, w2, b2, *, tile_n=None, chunk_n=None,
                       use_tanh_gelu=True):
    """x: (B, C, H, W) f32. w1: (hidden, 2), b1: (hidden,), w2: (2, hidden), b2: (2,)."""
    B, C, H, W = x.shape
    hidden = w1.shape[0]
    N = B * C * H * W

    # Lane-tile selection: amortize the per-step pipeline overhead with big
    # tiles, but keep >=~8 grid steps (when N allows) so v7x can shard the
    # "parallel" grid axis over its two TensorCores.
    if tile_n is None:
        cand = max(128, (N // 8) // 128 * 128)
        tile_n = int(min(4096, max(512, cand)))
    assert tile_n % 128 == 0, "tile_n must be a multiple of the 128-lane width"

    # Chunk selection: keep the live (hidden, chunk_n) f32 intermediate at
    # <= ~64 KiB (~16 vregs) so the kernel stays out of the spill regime.
    if chunk_n is None:
        budget_elems = (64 * 1024) // 4
        chunk_budget = max(128, (budget_elems // max(hidden, 1)) // 128 * 128)
        num_chunks = 1
        while (tile_n // num_chunks > chunk_budget
               and (tile_n // (num_chunks * 2)) % 128 == 0):
            num_chunks *= 2
        chunk_n = tile_n // num_chunks
    else:
        chunk_n = min(chunk_n, tile_n)
        assert chunk_n % 128 == 0 and tile_n % chunk_n == 0
        num_chunks = tile_n // chunk_n

    num_tiles = -(-N // tile_n)
    n_pad = num_tiles * tile_n

    # FFT (no Pallas primitive) -- plain JAX/XLA.
    x_fft = jnp.fft.fft2(x.astype(jnp.float32), norm="ortho")
    re = jnp.real(x_fft).reshape(N)
    im = jnp.imag(x_fft).reshape(N)
    if n_pad != N:
        # Ragged tail: padded lanes compute garbage from the biases and are
        # sliced off before the IFFT (correct, just wasted lanes).
        re = jnp.pad(re, (0, n_pad - N))
        im = jnp.pad(im, (0, n_pad - N))
    # (num_tiles, 2, tile_n): one contiguous HBM run per grid block.
    ft = jnp.stack([re.reshape(num_tiles, tile_n),
                    im.reshape(num_tiles, tile_n)], axis=1)

    kernel = functools.partial(
        _mlp_kernel, hidden=hidden, chunk_n=chunk_n, num_chunks=num_chunks,
        use_tanh_gelu=use_tanh_gelu)

    # Advisory cost estimate so XLA can schedule the call against the FFTs.
    cost = pl.CostEstimate(
        flops=8 * hidden * N,
        transcendentals=hidden * N,
        bytes_accessed=16 * N + 4 * int(w1.size + b1.size + w2.size + b2.size))

    out = pl.pallas_call(
        kernel,
        out_shape=jax.ShapeDtypeStruct((num_tiles, 2, tile_n), jnp.float32),
        grid=(num_tiles,),
        in_specs=[
            pl.BlockSpec((None, 2, tile_n), lambda i: (i, 0, 0)),   # freq tile
            pl.BlockSpec((hidden, 2), lambda i: (0, 0)),            # fc1 weight
            pl.BlockSpec((hidden, 1), lambda i: (0, 0)),            # fc1 bias
            pl.BlockSpec((2, hidden), lambda i: (0, 0)),            # fc2 weight
            pl.BlockSpec((2, 1), lambda i: (0, 0)),                 # fc2 bias
        ],
        out_specs=pl.BlockSpec((None, 2, tile_n), lambda i: (i, 0, 0)),
        compiler_params=pltpu.CompilerParams(
            dimension_semantics=("parallel",)),                     # v7x: 2 TCs
        cost_estimate=cost,
    )(ft, w1, b1.reshape(hidden, 1), w2, b2.reshape(2, 1))

    # Undo padding and rebuild the complex spectrum.
    out_re = out[:, 0, :].reshape(n_pad)[:N].reshape(B, C, H, W)
    out_im = out[:, 1, :].reshape(n_pad)[:N].reshape(B, C, H, W)
    # TODO(synk): fold real/imag into the sublane axis ((8, n/4) slab) if ld/st
    # slots ever become the bottleneck; current I/O tiles use 2 of 8 sublanes.
    x_filtered = lax.complex(out_re, out_im)
    x_out = jnp.real(jnp.fft.ifft2(x_filtered, norm="ortho"))
    return x_out


def _reference(x, w1, b1, w2, b2, use_tanh_gelu):
    """Pure-JAX reference of the same forward pass (full-precision matmuls)."""
    B, C, H, W = x.shape
    hp = lax.Precision.HIGHEST
    x_fft = jnp.fft.fft2(x.astype(jnp.float32), norm="ortho")
    fr = jnp.stack([jnp.real(x_fft), jnp.imag(x_fft)], axis=-1).reshape(-1, 2)
    h = _gelu(jnp.dot(fr, w1.T, precision=hp) + b1, use_tanh_gelu)
    f = (jnp.dot(h, w2.T, precision=hp) + b2).reshape(B, C, H, W, 2)
    return jnp.real(jnp.fft.ifft2(lax.complex(f[..., 0], f[..., 1]), norm="ortho"))


def init_params(key, hidden_dim):
    # nn.Linear-shaped params: fc1: (hidden, 2)+(hidden,), fc2: (2, hidden)+(2,).
    k1, k2, k3, k4 = jax.random.split(key, 4)
    bound1 = 1.0 / math.sqrt(2.0)
    bound2 = 1.0 / math.sqrt(hidden_dim)
    w1 = jax.random.uniform(k1, (hidden_dim, 2), jnp.float32, -bound1, bound1)
    b1 = jax.random.uniform(k2, (hidden_dim,), jnp.float32, -bound1, bound1)
    w2 = jax.random.uniform(k3, (2, hidden_dim), jnp.float32, -bound2, bound2)
    b2 = jax.random.uniform(k4, (2,), jnp.float32, -bound2, bound2)
    return w1, b1, w2, b2


if __name__ == "__main__":
    key = jax.random.PRNGKey(0)
    kx, kp = jax.random.split(key)

    B, C, H, W = 2, 4, 16, 16          # NCHW input, as in the PyTorch module
    hidden_dim = 32                    # AFNOBlock(dim=C, hidden_dim=32); `dim` unused in forward
    x = jax.random.normal(kx, (B, C, H, W), dtype=jnp.float32)
    w1, b1, w2, b2 = init_params(kp, hidden_dim)

    # Perf-default path (tanh GELU on the EUP) vs. matched-form reference.
    out_fast = jax.block_until_ready(afno_block_forward(x, w1, b1, w2, b2))
    assert out_fast.shape == (B, C, H, W)
    ref_fast = _reference(x, w1, b1, w2, b2, use_tanh_gelu=True)
    assert jnp.max(jnp.abs(out_fast - ref_fast)) < 1e-4

    # Exact-parity path (erf GELU == PyTorch F.gelu default semantics).
    out_exact = jax.block_until_ready(
        afno_block_forward(x, w1, b1, w2, b2, use_tanh_gelu=False))
    ref_exact = _reference(x, w1, b1, w2, b2, use_tanh_gelu=False)
    assert jnp.max(jnp.abs(out_exact - ref_exact)) < 1e-4

    print("KERNEL_OK")
</pallas_src>

<mosaic_0001>
module attributes {stable_mosaic.version = 11 : i64} {
  func.func @_mlp_kernel(%arg0: i32, %arg1: memref<1x2x512xf32, #tpu.memory_space<vmem>>, %arg2: memref<32x2xf32, #tpu.memory_space<vmem>>, %arg3: memref<32x1xf32, #tpu.memory_space<vmem>>, %arg4: memref<2x32xf32, #tpu.memory_space<vmem>>, %arg5: memref<2x1xf32, #tpu.memory_space<vmem>>, %arg6: memref<1x2x512xf32, #tpu.memory_space<vmem>>) attributes {dimension_semantics = [#tpu.dimension_semantics<parallel>], iteration_bounds = array<i64: 4>, scalar_prefetch = 0 : i64, scratch_operands = 0 : i64, tpu.core_type = #tpu.core_type<tc>, window_params = [{transform_indices = @transform_0, window_bounds = array<i64: 1, 2, 512>}, {pipeline_mode = #tpu.pipeline_mode<synchronous>, transform_indices = @transform_1, window_bounds = array<i64: 32, 2>}, {pipeline_mode = #tpu.pipeline_mode<synchronous>, transform_indices = @transform_2, window_bounds = array<i64: 32, 1>}, {pipeline_mode = #tpu.pipeline_mode<synchronous>, transform_indices = @transform_3, window_bounds = array<i64: 2, 32>}, {pipeline_mode = #tpu.pipeline_mode<synchronous>, transform_indices = @transform_4, window_bounds = array<i64: 2, 1>}, {transform_indices = @transform_5, window_bounds = array<i64: 1, 2, 512>}]} {
    %c0 = arith.constant 0 : index
    %c0_0 = arith.constant 0 : index
    %0 = vector.load %arg2[%c0, %c0_0] : memref<32x2xf32, #tpu.memory_space<vmem>>, vector<32x1xf32>
    %c0_1 = arith.constant 0 : index
    %c1 = arith.constant 1 : index
    %1 = vector.load %arg2[%c0_1, %c1] : memref<32x2xf32, #tpu.memory_space<vmem>>, vector<32x1xf32>
    %c0_2 = arith.constant 0 : index
    %c0_3 = arith.constant 0 : index
    %2 = vector.load %arg4[%c0_2, %c0_3] : memref<2x32xf32, #tpu.memory_space<vmem>>, vector<2x32xf32>
    %c0_4 = arith.constant 0 : index
    %c0_5 = arith.constant 0 : index
    %3 = vector.load %arg3[%c0_4, %c0_5] : memref<32x1xf32, #tpu.memory_space<vmem>>, vector<32x1xf32>
    %4 = vector.shape_cast %3 : vector<32x1xf32> to vector<32x1xf32>
    %5 = vector.broadcast %4 : vector<32x1xf32> to vector<32x512xf32>
    %c0_6 = arith.constant 0 : index
    %c0_7 = arith.constant 0 : index
    %6 = vector.load %arg5[%c0_6, %c0_7] : memref<2x1xf32, #tpu.memory_space<vmem>>, vector<2x1xf32>
    %7 = vector.shape_cast %6 : vector<2x1xf32> to vector<2x1xf32>
    %8 = vector.broadcast %7 : vector<2x1xf32> to vector<2x512xf32>
    %c0_i32 = arith.constant 0 : i32
    %c512_i32 = arith.constant 512 : i32
    %9 = arith.muli %c0_i32, %c512_i32 : i32
    %10 = tpu.assume_multiple %9, 512 : i32
    %c0_8 = arith.constant 0 : index
    %c0_9 = arith.constant 0 : index
    %11 = arith.index_cast %10 : i32 to index
    %12 = vector.load %arg1[%c0_8, %c0_9, %11] : memref<1x2x512xf32, #tpu.memory_space<vmem>>, vector<1x2x512xf32>
    %13 = vector.shape_cast %12 : vector<1x2x512xf32> to vector<2x512xf32>
    %14 = vector.extract_strided_slice %13 {offsets = [0, 0], sizes = [1, 512], strides = [1, 1]} : vector<2x512xf32> to vector<1x512xf32>
    %15 = vector.broadcast %0 : vector<32x1xf32> to vector<32x512xf32>
    %16 = vector.broadcast %14 : vector<1x512xf32> to vector<32x512xf32>
    %17 = arith.mulf %15, %16 : vector<32x512xf32>
    %18 = vector.extract_strided_slice %13 {offsets = [1, 0], sizes = [1, 512], strides = [1, 1]} : vector<2x512xf32> to vector<1x512xf32>
    %19 = vector.broadcast %1 : vector<32x1xf32> to vector<32x512xf32>
    %20 = vector.broadcast %18 : vector<1x512xf32> to vector<32x512xf32>
    %21 = arith.mulf %19, %20 : vector<32x512xf32>
    %22 = arith.addf %17, %21 : vector<32x512xf32>
    %23 = arith.addf %22, %5 : vector<32x512xf32>
    %cst = arith.constant 5.000000e-01 : f32
    %24 = vector.broadcast %cst : f32 to vector<32x512xf32>
    %25 = arith.mulf %24, %23 : vector<32x512xf32>
    %cst_10 = arith.constant 4.471500e-02 : f32
    %26 = vector.broadcast %cst_10 : f32 to vector<32x512xf32>
    %27 = arith.mulf %26, %23 : vector<32x512xf32>
    %28 = arith.mulf %27, %23 : vector<32x512xf32>
    %29 = arith.mulf %28, %23 : vector<32x512xf32>
    %30 = arith.addf %23, %29 : vector<32x512xf32>
    %cst_11 = arith.constant 0.797884583 : f32
    %31 = vector.broadcast %cst_11 : f32 to vector<32x512xf32>
    %32 = arith.mulf %31, %30 : vector<32x512xf32>
    %33 = math.tanh %32 : vector<32x512xf32>
    %cst_12 = arith.constant 1.000000e+00 : f32
    %34 = vector.broadcast %cst_12 : f32 to vector<32x512xf32>
    %35 = arith.addf %34, %33 : vector<32x512xf32>
    %36 = arith.mulf %25, %35 : vector<32x512xf32>
    %cst_13 = arith.constant dense<0.000000e+00> : vector<2x512xf32>
    %37 = tpu.matmul %2, %36, %cst_13 {dimension_numbers = #tpu.dot_dimension_numbers<[1], [0], [0], [1], [0, 0, 1, 1], [], []>} : vector<2x32xf32>, vector<32x512xf32>, vector<2x512xf32> -> vector<2x512xf32>
    %38 = arith.addf %37, %8 : vector<2x512xf32>
    %c0_14 = arith.constant 0 : index
    %c0_15 = arith.constant 0 : index
    %39 = arith.index_cast %10 : i32 to index
    %40 = vector.load %arg6[%c0_14, %c0_15, %39] : memref<1x2x512xf32, #tpu.memory_space<vmem>>, vector<1x2x512xf32>
    %41 = vector.shape_cast %40 : vector<1x2x512xf32> to vector<2x512xf32>
    %42 = vector.shape_cast %38 : vector<2x512xf32> to vector<1x2x512xf32>
    tpu.vector_store %arg6[%c0_14, %c0_15, %39], %42 {strides = array<i32>} : memref<1x2x512xf32, #tpu.memory_space<vmem>>, vector<1x2x512xf32>,
    %c1_i32 = arith.constant 1 : i32
    return
  }
  func.func @transform_0(%arg0: i32) -> (i32, i32, i32) {
    %c0_i32 = arith.constant 0 : i32
    %c0_i32_0 = arith.constant 0 : i32
    %c0_i32_1 = arith.constant 0 : i32
    return %arg0, %c0_i32, %c0_i32_0 : i32, i32, i32
  }
  func.func @transform_1(%arg0: i32) -> (i32, i32) {
    %c0_i32 = arith.constant 0 : i32
    %c0_i32_0 = arith.constant 0 : i32
    %c0_i32_1 = arith.constant 0 : i32
    return %c0_i32, %c0_i32_0 : i32, i32
  }
  func.func @transform_2(%arg0: i32) -> (i32, i32) {
    %c0_i32 = arith.constant 0 : i32
    %c0_i32_0 = arith.constant 0 : i32
    %c0_i32_1 = arith.constant 0 : i32
    return %c0_i32, %c0_i32_0 : i32, i32
  }
  func.func @transform_3(%arg0: i32) -> (i32, i32) {
    %c0_i32 = arith.constant 0 : i32
    %c0_i32_0 = arith.constant 0 : i32
    %c0_i32_1 = arith.constant 0 : i32
    return %c0_i32, %c0_i32_0 : i32, i32
  }
  func.func @transform_4(%arg0: i32) -> (i32, i32) {
    %c0_i32 = arith.constant 0 : i32
    %c0_i32_0 = arith.constant 0 : i32
    %c0_i32_1 = arith.constant 0 : i32
    return %c0_i32, %c0_i32_0 : i32, i32
  }
  func.func @transform_5(%arg0: i32) -> (i32, i32, i32) {
    %c0_i32 = arith.constant 0 : i32
    %c0_i32_0 = arith.constant 0 : i32
    %c0_i32_1 = arith.constant 0 : i32
    return %arg0, %c0_i32, %c0_i32_0 : i32, i32, i32
  }
}

</mosaic_0001>

<llo_original>
// kernel: tpu_custom_call.1
$region0: #{tpu_custom_call.1}
  #allocation0 [shape = 'u32[]', space=smem, size = 0x4, offset = 0x4, fixed_abs, tag = 'smem constant byte address 0x4 - core index']
  #allocation1 [shape = 'u32[144,128]{1,0:T(1,128)}', space=vmem, size = 0x12000, scoped, tag = 'internal scratch']
  %s0 = inlined_call_operand.vmem [shape: f32[4,2,512], index: 0, kind: input, shape index: {}]
  %s1 = inlined_call_operand.vmem [shape: f32[32,2], index: 1, kind: input, shape index: {}]
  %s2 = inlined_call_operand.vmem [shape: f32[32,1], index: 2, kind: input, shape index: {}]
  %s3 = inlined_call_operand.vmem [shape: f32[2,32], index: 3, kind: input, shape index: {}]
  %s4 = inlined_call_operand.vmem [shape: f32[2,1], index: 4, kind: input, shape index: {}]
  %s5 = inlined_call_operand.hbm [shape: f32[4,2,512], index: 5, kind: output, shape index: {}]
  %s6 = sld [smem:[#allocation0]]
  $region53: #{tpu_custom_call.1} parent=0
    _
  %s8 = ssub.s32 1, %s6
  %s9 = scalar_select 0, %s8, %s6
  $region1: #{tpu_custom_call.1} parent=0
    #allocation2 [shape = 'u8[8192]{0}', space=vmem, size = 0x2000, scoped, tag = 'output window, operand 0']
    #allocation3 [shape = 's32[2]{0}', space=sflag, size = 0x8, scoped, tag = 'scoped memory for tpu_custom_call.1']
    %10 = vsyncpa [#allocation3], 0
    %s11 = scalar_lea.sflag [#allocation3], 1
    %12 = vsyncpa %s11, 0
    loop: start=0, step=1, limit=6
    $region2: #{tpu_custom_call.1} parent=1 // loop_pre_header
      _
    $region3: #{tpu_custom_call.1} parent=1 // loop_header
      %s14 = sphi 0, %s18
      %p15 = scmp.ge.s32.totalorder %s14, 6
      %s24 = sphi 0, %s26
      %s27 = sphi 0, %s24
      %s28 = sphi 0, %s27
      %s44 = sphi 0, %s28
      %s48 = sphi 0, %s48
      %s50 = sphi 0, %s48
      %s51 = sphi 0, %s50
      %s65 = sphi 0, %s51
      %s69 = sphi 0, %s69
      %s71 = sphi 0, %s69
      %s72 = sphi 0, %s71
      %s86 = sphi 0, %s72
      %s90 = sphi 0, %s90
      %s92 = sphi 0, %s90
      %s93 = sphi 0, %s92
      %s107 = sphi 0, %s93
      %s111 = sphi 0, %s111
      %s113 = sphi 0, %s111
      %s114 = sphi 0, %s113
      %s128 = sphi 0, %s114
      %s134 = sphi 0, %s136
      %s137 = sphi 0, %s134
      %s138 = sphi 0, %s137
      %s154 = sphi 0, %s138
    $region4: #{tpu_custom_call.1} parent=1 // loop_header_branch
      %17 = sbr.rel (%p15) target = $region8
    $region5: #{tpu_custom_call.1} parent=1 // loop_body
      %s19 = ssub.s32 %s14, 1
      %s20 = ssub.s32 %s14, 2
      %s21 = sadd.s32 %s14, 1
      %s22 = ssub.s32 %s14, %s21
      %p23 = scmp.eq.s32.totalorder %s22, 0
      %s25 = sadd.s32 %s24, 1
      %s26 = scalar_select %p23, %s24, %s25
      %p29 = pneg %p23
      %p30 = scmp.eq.s32.totalorder %s14, 3
      %p31 = por %p29, %p30
      %p32 = scmp.ne.s32.totalorder %s24, %s27
      %p33 = scmp.eq.s32.totalorder %s14, 0
      %p34 = por %p32, %p33
      %p35 = scmp.ne.s32.totalorder %s24, %s27
      %p36 = scmp.eq.s32.totalorder %s19, 3
      %p37 = por %p35, %p36
      %p38 = scmp.ne.s32.totalorder %s27, %s28
      %p39 = scmp.eq.s32.totalorder %s19, 0
      %p40 = por %p38, %p39
      %p41 = scmp.ne.s32.totalorder %s27, %s28
      %p42 = scmp.eq.s32.totalorder %s20, 3
      %p43 = por %p41, %p42
      %p45 = scmp.ne.s32.totalorder %s28, %s44
      %p46 = scmp.eq.s32.totalorder %s20, 0
      %p47 = por %p45, %p46
      %s49 = sadd.s32 %s48, 1
      %p52 = scmp.eq.s32.totalorder %s14, 3
      %p53 = scmp.ne.s32.totalorder %s48, %s50
      %p54 = scmp.eq.s32.totalorder %s14, 0
      %p55 = por %p53, %p54
      %p56 = scmp.ne.s32.totalorder %s48, %s50
      %p57 = scmp.eq.s32.totalorder %s19, 3
      %p58 = por %p56, %p57
      %p59 = scmp.ne.s32.totalorder %s50, %s51
      %p60 = scmp.eq.s32.totalorder %s19, 0
      %p61 = por %p59, %p60
      %p62 = scmp.ne.s32.totalorder %s50, %s51
      %p63 = scmp.eq.s32.totalorder %s20, 3
      %p64 = por %p62, %p63
      %p66 = scmp.ne.s32.totalorder %s51, %s65
      %p67 = scmp.eq.s32.totalorder %s20, 0
      %p68 = por %p66, %p67
      %s70 = sadd.s32 %s69, 1
      %p73 = scmp.eq.s32.totalorder %s14, 3
      %p74 = scmp.ne.s32.totalorder %s69, %s71
      %p75 = scmp.eq.s32.totalorder %s14, 0
      %p76 = por %p74, %p75
      %p77 = scmp.ne.s32.totalorder %s69, %s71
      %p78 = scmp.eq.s32.totalorder %s19, 3
      %p79 = por %p77, %p78
      %p80 = scmp.ne.s32.totalorder %s71, %s72
      %p81 = scmp.eq.s32.totalorder %s19, 0
      %p82 = por %p80, %p81
      %p83 = scmp.ne.s32.totalorder %s71, %s72
      %p84 = scmp.eq.s32.totalorder %s20, 3
      %p85 = por %p83, %p84
      %p87 = scmp.ne.s32.totalorder %s72, %s86
      %p88 = scmp.eq.s32.totalorder %s20, 0
      %p89 = por %p87, %p88
      %s91 = sadd.s32 %s90, 1
      %p94 = scmp.eq.s32.totalorder %s14, 3
      %p95 = scmp.ne.s32.totalorder %s90, %s92
      %p96 = scmp.eq.s32.totalorder %s14, 0
      %p97 = por %p95, %p96
      %p98 = scmp.ne.s32.totalorder %s90, %s92
      %p99 = scmp.eq.s32.totalorder %s19, 3
      %p100 = por %p98, %p99
      %p101 = scmp.ne.s32.totalorder %s92, %s93
      %p102 = scmp.eq.s32.totalorder %s19, 0
      %p103 = por %p101, %p102
      %p104 = scmp.ne.s32.totalorder %s92, %s93
      %p105 = scmp.eq.s32.totalorder %s20, 3
      %p106 = por %p104, %p105
      %p108 = scmp.ne.s32.totalorder %s93, %s107
      %p109 = scmp.eq.s32.totalorder %s20, 0
      %p110 = por %p108, %p109
      %s112 = sadd.s32 %s111, 1
      %p115 = scmp.eq.s32.totalorder %s14, 3
      %p116 = scmp.ne.s32.totalorder %s111, %s113
      %p117 = scmp.eq.s32.totalorder %s14, 0
      %p118 = por %p116, %p117
      %p119 = scmp.ne.s32.totalorder %s111, %s113
      %p120 = scmp.eq.s32.totalorder %s19, 3
      %p121 = por %p119, %p120
      %p122 = scmp.ne.s32.totalorder %s113, %s114
      %p123 = scmp.eq.s32.totalorder %s19, 0
      %p124 = por %p122, %p123
      %p125 = scmp.ne.s32.totalorder %s113, %s114
      %p126 = scmp.eq.s32.totalorder %s20, 3
      %p127 = por %p125, %p126
      %p129 = scmp.ne.s32.totalorder %s114, %s128
      %p130 = scmp.eq.s32.totalorder %s20, 0
      %p131 = por %p129, %p130
      %s132 = ssub.s32 %s14, %s21
      %p133 = scmp.eq.s32.totalorder %s132, 0
      %s135 = sadd.s32 %s134, 1
      %s136 = scalar_select %p133, %s134, %s135
      %p139 = pneg %p133
      %p140 = scmp.eq.s32.totalorder %s14, 3
      %p141 = por %p139, %p140
      %p142 = scmp.ne.s32.totalorder %s134, %s137
      %p143 = scmp.eq.s32.totalorder %s14, 0
      %p144 = por %p142, %p143
      %p145 = scmp.ne.s32.totalorder %s134, %s137
      %p146 = scmp.eq.s32.totalorder %s19, 3
      %p147 = por %p145, %p146
      %p148 = scmp.ne.s32.totalorder %s137, %s138
      %p149 = scmp.eq.s32.totalorder %s19, 0
      %p150 = por %p148, %p149
      %p151 = scmp.ne.s32.totalorder %s137, %s138
      %p152 = scmp.eq.s32.totalorder %s20, 3
      %p153 = por %p151, %p152
      %p155 = scmp.ne.s32.totalorder %s138, %s154
      %p156 = scmp.eq.s32.totalorder %s20, 0
      %p157 = por %p155, %p156
      %p158 = scmp.le.s32.totalorder 1, %s14
      %p159 = scmp.lt.s32.totalorder %s14, 5
      %p160 = pnand %p158, %p159
      %p161 = pneg %p160
      // Predicated region
      $region9: #{tpu_custom_call.1} parent=5 // pred_check
        _
      $region10: #{tpu_custom_call.1} parent=5 // pred_check_branch
        %163 = sbr.rel (%p160) target = $region12
      $region11: #{tpu_custom_call.1} parent=5 // pred_region
        %s164 = ssub.s32 %s14, 1
        // Predicated region
        $region13: #{tpu_custom_call.1} parent=11 // pred_check
          %p165 = pneg %p61
        $region14: #{tpu_custom_call.1} parent=11 // pred_check_branch
          %167 = sbr.rel (%p165) target = $region16
        $region15: #{tpu_custom_call.1} parent=11 // pred_region
          _
        $region16: #{tpu_custom_call.1} parent=11 // pred_fallthru
          _
        // Predicated region
        $region17: #{tpu_custom_call.1} parent=11 // pred_check
          %p168 = pneg %p82
        $region18: #{tpu_custom_call.1} parent=11 // pred_check_branch
          %170 = sbr.rel (%p168) target = $region20
        $region19: #{tpu_custom_call.1} parent=11 // pred_region
          _
        $region20: #{tpu_custom_call.1} parent=11 // pred_fallthru
          _
        // Predicated region
        $region21: #{tpu_custom_call.1} parent=11 // pred_check
          %p171 = pneg %p103
        $region22: #{tpu_custom_call.1} parent=11 // pred_check_branch
          %173 = sbr.rel (%p171) target = $region24
        $region23: #{tpu_custom_call.1} parent=11 // pred_region
          _
        $region24: #{tpu_custom_call.1} parent=11 // pred_fallthru
          _
        // Predicated region
        $region25: #{tpu_custom_call.1} parent=11 // pred_check
          %p174 = pneg %p124
        $region26: #{tpu_custom_call.1} parent=11 // pred_check_branch
          %176 = sbr.rel (%p174) target = $region28
        $region27: #{tpu_custom_call.1} parent=11 // pred_region
          _
        $region28: #{tpu_custom_call.1} parent=11 // pred_fallthru
          _
      $region12: #{tpu_custom_call.1} parent=5 // pred_fallthru
        _
      %p177 = scmp.lt.s32.totalorder %s14, 4
      // Predicated region
      $region29: #{tpu_custom_call.1} parent=5 // pred_check
        %p178 = pneg %p177
      $region30: #{tpu_custom_call.1} parent=5 // pred_check_branch
        %180 = sbr.rel (%p178) target = $region32
      $region31: #{tpu_custom_call.1} parent=5 // pred_region
        // Predicated region
        $region33: #{tpu_custom_call.1} parent=31 // pred_check
          %p181 = pneg %p34
        $region34: #{tpu_custom_call.1} parent=31 // pred_check_branch
          %183 = sbr.rel (%p181) target = $region36
        $region35: #{tpu_custom_call.1} parent=31 // pred_region
          %p184 = scmp.lt.s32.totalorder %s14, 3
          %s185 = scalar_select %p184, %s14, 3
          %s186 = smul.addr %s185, 4
          %s187 = smul.addr %s186, 2
          %s188 = scalar_lea.vmem %s0, %s187
        $region36: #{tpu_custom_call.1} parent=31 // pred_fallthru
          _
      $region32: #{tpu_custom_call.1} parent=5 // pred_fallthru
        _
      %p189 = scmp.le.s32.totalorder 1, %s14
      %p190 = scmp.lt.s32.totalorder %s14, 5
      %p191 = pnand %p189, %p190
      %p192 = pneg %p191
      // Predicated region
      $region37: #{tpu_custom_call.1} parent=5 // pred_check
        _
      $region38: #{tpu_custom_call.1} parent=5 // pred_check_branch
        %194 = sbr.rel (%p191) target = $region40
      $region39: #{tpu_custom_call.1} parent=5 // pred_region
        %s195 = ssub.s32 %s14, 1
        %p196 = scmp.lt.s32.totalorder %s19, 3
        %s197 = scalar_select %p196, %s19, 3
        %s198 = smul.addr %s197, 4
        %s199 = smul.addr %s198, 2
        %s200 = scalar_lea.vmem %s0, %s199
        %p201 = pneg %p40
        %p202 = pneg %p37
        %p203 = pneg %p61
        %p204 = pneg %p58
        %p205 = pneg %p82
        %p206 = pneg %p79
        %p207 = pneg %p103
        %p208 = pneg %p100
        %p209 = pneg %p124
        %p210 = pneg %p121
        %p211 = pneg %p150
        %p212 = pneg %p147
        %s213 = sand.u32 %s137, 1
        %s214 = scalar_lea.sflag [#allocation3], %s213
        %s215 = sand.u32 %s137, 1
        %s216 = smul.addr %s215, 8
        %s217 = scalar_lea.vmem [#allocation2], %s216
        %p218 = scmp.lt.s32.totalorder %s19, 3
        %s219 = scalar_select %p218, %s19, 3
        %s220 = smul.addr %s219, 4
        %s221 = smul.addr %s220, 2
        %s222 = scalar_lea.vmem %s0, %s221
        %v223 = vld [vmem:[%s1] sm:$0xff]
        %v224 = vld [vmem:[%s1 + $0x8] sm:$0xff]
        %v225 = vld [vmem:[%s1 + $0x10] sm:$0xff]
        %v226 = vld [vmem:[%s1 + $0x18] sm:$0xff]
        %v227 = vld [vmem:[%s3] sm:$0x3]
        %v228 = vld [vmem:[%s2] sm:$0xff]
        %v229 = vld [vmem:[%s2 + $0x8] sm:$0xff]
        %v230 = vld [vmem:[%s2 + $0x10] sm:$0xff]
        %v231 = vld [vmem:[%s2 + $0x18] sm:$0xff]
        %233 = vset.pattern.permute.xlu0 0
        %234 = vperm.xlu0 %233, %v228
        %v235 = vpop.permute.xlu0 %234
        %238 = vset.pattern.permute.xlu0 0
        %239 = vperm.xlu0 %238, %v229
        %v240 = vpop.permute.xlu0 %239
        %243 = vset.pattern.permute.xlu0 0
        %244 = vperm.xlu0 %243, %v230
        %v245 = vpop.permute.xlu0 %244
        %248 = vset.pattern.permute.xlu0 0
        %249 = vperm.xlu0 %248, %v231
        %v250 = vpop.permute.xlu0 %249
        %v252 = vld [vmem:[%s4] sm:$0x3]
        %254 = vset.pattern.permute.xlu0 0
        %255 = vperm.xlu0 %254, %v252
        %v256 = vpop.permute.xlu0 %255
        %v258 = vld [vmem:[%s222] sm:$0xff]
        %260 = vset.pattern.permute.xlu0 0
        %261 = vperm.xlu0 %260, %v223
        %v262 = vpop.permute.xlu0 %261
        %265 = vset.pattern.permute.xlu0 0
        %266 = vperm.xlu0 %265, %v224
        %v267 = vpop.permute.xlu0 %266
        %270 = vset.pattern.permute.xlu0 0
        %271 = vperm.xlu0 %270, %v225
        %v272 = vpop.permute.xlu0 %271
        %275 = vset.pattern.permute.xlu0 0
        %276 = vperm.xlu0 %275, %v226
        %v277 = vpop.permute.xlu0 %276
        %v280 = vlaneseq
        %v281 = vshrl.u32 %v280, 7
        %v282 = vsub.s32 0, %v281
        %v283 = vrot.slane %v258, %v282
        %v284 = vlaneseq
        %v285 = vshrl.u32 %v284, 7
        %v286 = vsub.s32 2, %v285
        %v287 = vrot.slane %v258, %v286
        %v288 = vlaneseq
        %v289 = vshrl.u32 %v288, 7
        %v290 = vsub.s32 4, %v289
        %v291 = vrot.slane %v258, %v290
        %v292 = vlaneseq
        %v293 = vshrl.u32 %v292, 7
        %v294 = vsub.s32 6, %v293
        %v295 = vrot.slane %v258, %v294
        %v300 = vlaneseq
        %v301 = vshrl.u32 %v300, 7
        %v302 = vsub.s32 0, %v301
        %v303 = vrot.slane %v283, %v302
        %v304 = vlaneseq
        %v305 = vshrl.u32 %v304, 7
        %v306 = vsub.s32 0, %v305
        %v307 = vrot.slane %v287, %v306
        %v308 = vlaneseq
        %v309 = vshrl.u32 %v308, 7
        %v310 = vsub.s32 0, %v309
        %v311 = vrot.slane %v291, %v310
        %v312 = vlaneseq
        %v313 = vshrl.u32 %v312, 7
        %v314 = vsub.s32 0, %v313
        %v315 = vrot.slane %v295, %v314
        %v316 = vmul.f32 %v262, %v303
        %v317 = vmul.f32 %v262, %v307
        %v318 = vmul.f32 %v262, %v311
        %v319 = vmul.f32 %v262, %v315
        %v320 = vmul.f32 %v267, %v303
        %v321 = vmul.f32 %v267, %v307
        %v322 = vmul.f32 %v267, %v311
        %v323 = vmul.f32 %v267, %v315
        %v324 = vmul.f32 %v272, %v303
        %v325 = vmul.f32 %v272, %v307
        %v326 = vmul.f32 %v272, %v311
        %v327 = vmul.f32 %v272, %v315
        %v328 = vmul.f32 %v277, %v303
        %v329 = vmul.f32 %v277, %v307
        %v330 = vmul.f32 %v277, %v311
        %v331 = vmul.f32 %v277, %v315
        %332 = vset.pattern.permute.xlu0 1
        %333 = vperm.xlu0 %332, %v223
        %v334 = vpop.permute.xlu0 %333
        %336 = vset.pattern.permute.xlu0 1
        %337 = vperm.xlu0 %336, %v224
        %v338 = vpop.permute.xlu0 %337
        %340 = vset.pattern.permute.xlu0 1
        %341 = vperm.xlu0 %340, %v225
        %v342 = vpop.permute.xlu0 %341
        %344 = vset.pattern.permute.xlu0 1
        %345 = vperm.xlu0 %344, %v226
        %v346 = vpop.permute.xlu0 %345
        %v348 = vlaneseq
        %v349 = vshrl.u32 %v348, 7
        %v350 = vsub.s32 1, %v349
        %v351 = vrot.slane %v258, %v350
        %v352 = vlaneseq
        %v353 = vshrl.u32 %v352, 7
        %v354 = vsub.s32 3, %v353
        %v355 = vrot.slane %v258, %v354
        %v356 = vlaneseq
        %v357 = vshrl.u32 %v356, 7
        %v358 = vsub.s32 5, %v357
        %v359 = vrot.slane %v258, %v358
        %v360 = vlaneseq
        %v361 = vshrl.u32 %v360, 7
        %v362 = vsub.s32 7, %v361
        %v363 = vrot.slane %v258, %v362
        %v368 = vlaneseq
        %v369 = vshrl.u32 %v368, 7
        %v370 = vsub.s32 1, %v369
        %v371 = vrot.slane %v351, %v370
        %v372 = vlaneseq
        %v373 = vshrl.u32 %v372, 7
        %v374 = vsub.s32 1, %v373
        %v375 = vrot.slane %v355, %v374
        %v376 = vlaneseq
        %v377 = vshrl.u32 %v376, 7
        %v378 = vsub.s32 1, %v377
        %v379 = vrot.slane %v359, %v378
        %v380 = vlaneseq
        %v381 = vshrl.u32 %v380, 7
        %v382 = vsub.s32 1, %v381
        %v383 = vrot.slane %v363, %v382
        %v384 = vmul.f32 %v334, %v371
        %v385 = vmul.f32 %v334, %v375
        %v386 = vmul.f32 %v334, %v379
        %v387 = vmul.f32 %v334, %v383
        %v388 = vmul.f32 %v338, %v371
        %v389 = vmul.f32 %v338, %v375
        %v390 = vmul.f32 %v338, %v379
        %v391 = vmul.f32 %v338, %v383
        %v392 = vmul.f32 %v342, %v371
        %v393 = vmul.f32 %v342, %v375
        %v394 = vmul.f32 %v342, %v379
        %v395 = vmul.f32 %v342, %v383
        %v396 = vmul.f32 %v346, %v371
        %v397 = vmul.f32 %v346, %v375
        %v398 = vmul.f32 %v346, %v379
        %v399 = vmul.f32 %v346, %v383
        %v400 = vadd.f32 %v316, %v384
        %v401 = vadd.f32 %v317, %v385
        %v402 = vadd.f32 %v318, %v386
        %v403 = vadd.f32 %v319, %v387
        %v404 = vadd.f32 %v320, %v388
        %v405 = vadd.f32 %v321, %v389
        %v406 = vadd.f32 %v322, %v390
        %v407 = vadd.f32 %v323, %v391
        %v408 = vadd.f32 %v324, %v392
        %v409 = vadd.f32 %v325, %v393
        %v410 = vadd.f32 %v326, %v394
        %v411 = vadd.f32 %v327, %v395
        %v412 = vadd.f32 %v328, %v396
        %v413 = vadd.f32 %v329, %v397
        %v414 = vadd.f32 %v330, %v398
        %v415 = vadd.f32 %v331, %v399
        %v416 = vadd.f32 %v400, %v235
        %v417 = vadd.f32 %v401, %v235
        %v418 = vadd.f32 %v402, %v235
        %v419 = vadd.f32 %v403, %v235
        %v420 = vadd.f32 %v404, %v240
        %v421 = vadd.f32 %v405, %v240
        %v422 = vadd.f32 %v406, %v240
        %v423 = vadd.f32 %v407, %v240
        %v424 = vadd.f32 %v408, %v245
        %v425 = vadd.f32 %v409, %v245
        %v426 = vadd.f32 %v410, %v245
        %v427 = vadd.f32 %v411, %v245
        %v428 = vadd.f32 %v412, %v250
        %v429 = vadd.f32 %v413, %v250
        %v430 = vadd.f32 %v414, %v250
        %v431 = vadd.f32 %v415, %v250
        %v432 = vmul.f32 %v416, 0.5
        %v433 = vmul.f32 %v417, 0.5
        %v434 = vmul.f32 %v418, 0.5
        %v435 = vmul.f32 %v419, 0.5
        %v436 = vmul.f32 %v420, 0.5
        %v437 = vmul.f32 %v421, 0.5
        %v438 = vmul.f32 %v422, 0.5
        %v439 = vmul.f32 %v423, 0.5
        %v440 = vmul.f32 %v424, 0.5
        %v441 = vmul.f32 %v425, 0.5
        %v442 = vmul.f32 %v426, 0.5
        %v443 = vmul.f32 %v427, 0.5
        %v444 = vmul.f32 %v428, 0.5
        %v445 = vmul.f32 %v429, 0.5
        %v446 = vmul.f32 %v430, 0.5
        %v447 = vmul.f32 %v431, 0.5
        %v448 = vmul.f32 %v416, 0.044715
        %v449 = vmul.f32 %v417, 0.044715
        %v450 = vmul.f32 %v418, 0.044715
        %v451 = vmul.f32 %v419, 0.044715
        %v452 = vmul.f32 %v420, 0.044715
        %v453 = vmul.f32 %v421, 0.044715
        %v454 = vmul.f32 %v422, 0.044715
        %v455 = vmul.f32 %v423, 0.044715
        %v456 = vmul.f32 %v424, 0.044715
        %v457 = vmul.f32 %v425, 0.044715
        %v458 = vmul.f32 %v426, 0.044715
        %v459 = vmul.f32 %v427, 0.044715
        %v460 = vmul.f32 %v428, 0.044715
        %v461 = vmul.f32 %v429, 0.044715
        %v462 = vmul.f32 %v430, 0.044715
        %v463 = vmul.f32 %v431, 0.044715
        %v464 = vmul.f32 %v448, %v416
        %v465 = vmul.f32 %v449, %v417
        %v466 = vmul.f32 %v450, %v418
        %v467 = vmul.f32 %v451, %v419
        %v468 = vmul.f32 %v452, %v420
        %v469 = vmul.f32 %v453, %v421
        %v470 = vmul.f32 %v454, %v422
        %v471 = vmul.f32 %v455, %v423
        %v472 = vmul.f32 %v456, %v424
        %v473 = vmul.f32 %v457, %v425
        %v474 = vmul.f32 %v458, %v426
        %v475 = vmul.f32 %v459, %v427
        %v476 = vmul.f32 %v460, %v428
        %v477 = vmul.f32 %v461, %v429
        %v478 = vmul.f32 %v462, %v430
        %v479 = vmul.f32 %v463, %v431
        %v480 = vmul.f32 %v464, %v416
        %v481 = vmul.f32 %v465, %v417
        %v482 = vmul.f32 %v466, %v418
        %v483 = vmul.f32 %v467, %v419
        %v484 = vmul.f32 %v468, %v420
        %v485 = vmul.f32 %v469, %v421
        %v486 = vmul.f32 %v470, %v422
        %v487 = vmul.f32 %v471, %v423
        %v488 = vmul.f32 %v472, %v424
        %v489 = vmul.f32 %v473, %v425
        %v490 = vmul.f32 %v474, %v426
        %v491 = vmul.f32 %v475, %v427
        %v492 = vmul.f32 %v476, %v428
        %v493 = vmul.f32 %v477, %v429
        %v494 = vmul.f32 %v478, %v430
        %v495 = vmul.f32 %v479, %v431
        %v496 = vadd.f32 %v416, %v480
        %v497 = vadd.f32 %v417, %v481
        %v498 = vadd.f32 %v418, %v482
        %v499 = vadd.f32 %v419, %v483
        %v500 = vadd.f32 %v420, %v484
        %v501 = vadd.f32 %v421, %v485
        %v502 = vadd.f32 %v422, %v486
        %v503 = vadd.f32 %v423, %v487
        %v504 = vadd.f32 %v424, %v488
        %v505 = vadd.f32 %v425, %v489
        %v506 = vadd.f32 %v426, %v490
        %v507 = vadd.f32 %v427, %v491
        %v508 = vadd.f32 %v428, %v492
        %v509 = vadd.f32 %v429, %v493
        %v510 = vadd.f32 %v430, %v494
        %v511 = vadd.f32 %v431, %v495
        %v512 = vmul.f32 %v496, 0.7978846
        %v513 = vmul.f32 %v497, 0.7978846
        %v514 = vmul.f32 %v498, 0.7978846
        %v515 = vmul.f32 %v499, 0.7978846
        %v516 = vmul.f32 %v500, 0.7978846
        %v517 = vmul.f32 %v501, 0.7978846
        %v518 = vmul.f32 %v502, 0.7978846
        %v519 = vmul.f32 %v503, 0.7978846
        %v520 = vmul.f32 %v504, 0.7978846
        %v521 = vmul.f32 %v505, 0.7978846
        %v522 = vmul.f32 %v506, 0.7978846
        %v523 = vmul.f32 %v507, 0.7978846
        %v524 = vmul.f32 %v508, 0.7978846
        %v525 = vmul.f32 %v509, 0.7978846
        %v526 = vmul.f32 %v510, 0.7978846
        %v527 = vmul.f32 %v511, 0.7978846
        %v528 = vtanh.pop %v512
        %v529 = vtanh.pop %v513
        %v530 = vtanh.pop %v514
        %v531 = vtanh.pop %v515
        %v532 = vtanh.pop %v516
        %v533 = vtanh.pop %v517
        %v534 = vtanh.pop %v518
        %v535 = vtanh.pop %v519
        %v536 = vtanh.pop %v520
        %v537 = vtanh.pop %v521
        %v538 = vtanh.pop %v522
        %v539 = vtanh.pop %v523
        %v540 = vtanh.pop %v524
        %v541 = vtanh.pop %v525
        %v542 = vtanh.pop %v526
        %v543 = vtanh.pop %v527
        %v544 = vadd.f32 %v528, 1.0
        %v545 = vadd.f32 %v529, 1.0
        %v546 = vadd.f32 %v530, 1.0
        %v547 = vadd.f32 %v531, 1.0
        %v548 = vadd.f32 %v532, 1.0
        %v549 = vadd.f32 %v533, 1.0
        %v550 = vadd.f32 %v534, 1.0
        %v551 = vadd.f32 %v535, 1.0
        %v552 = vadd.f32 %v536, 1.0
        %v553 = vadd.f32 %v537, 1.0
        %v554 = vadd.f32 %v538, 1.0
        %v555 = vadd.f32 %v539, 1.0
        %v556 = vadd.f32 %v540, 1.0
        %v557 = vadd.f32 %v541, 1.0
        %v558 = vadd.f32 %v542, 1.0
        %v559 = vadd.f32 %v543, 1.0
        %v560 = vmul.f32 %v432, %v544
        %v561 = vmul.f32 %v433, %v545
        %v562 = vmul.f32 %v434, %v546
        %v563 = vmul.f32 %v435, %v547
        %v564 = vmul.f32 %v436, %v548
        %v565 = vmul.f32 %v437, %v549
        %v566 = vmul.f32 %v438, %v550
        %v567 = vmul.f32 %v439, %v551
        %v568 = vmul.f32 %v440, %v552
        %v569 = vmul.f32 %v441, %v553
        %v570 = vmul.f32 %v442, %v554
        %v571 = vmul.f32 %v443, %v555
        %v572 = vmul.f32 %v444, %v556
        %v573 = vmul.f32 %v445, %v557
        %v574 = vmul.f32 %v446, %v558
        %v575 = vmul.f32 %v447, %v559
        %vm576 = vcmask 261120
        %v578 = vsel %vm576, %v227, 0
        %580 = vmatprep.subr.mxu0 0.0
        %581 = vmatpush1.msra.mxu0 0.0
        %582 = vmatprep.subr.mxu0 0.0
        %583 = vmatpush1.msra.mxu0 0.0
        %584 = vmatprep.subr.mxu0 0.0
        %585 = vmatpush1.msra.mxu0 0.0
        %586 = vmatprep.subr.mxu0 0.0
        %587 = vmatpush1.msra.mxu0 0.0
        %588 = vmatprep.subr.mxu0 0.0
        %589 = vmatpush1.msra.mxu0 0.0
        %590 = vmatprep.subr.mxu0 0.0
        %591 = vmatpush1.msra.mxu0 0.0
        %592 = vmatprep.subr.mxu0 0.0
        %593 = vmatpush1.msra.mxu0 0.0
        %594 = vmatprep.subr.mxu0 0.0
        %595 = vmatpush1.msra.mxu0 0.0
        %596 = vmatprep.subr.mxu0 0.0
        %597 = vmatpush1.msra.mxu0 0.0
        %598 = vmatprep.subr.mxu0 0.0
        %599 = vmatpush1.msra.mxu0 0.0
        %600 = vmatprep.subr.mxu0 0.0
        %601 = vmatpush1.msra.mxu0 0.0
        %602 = vmatprep.subr.mxu0 0.0
        %603 = vmatpush1.msra.mxu0 0.0
        %604 = vmatprep.subr.mxu0 %v573
        %605 = vmatpush1.msra.mxu0 %v572
        %606 = vmatprep.subr.mxu0 %v569
        %607 = vmatpush1.msra.mxu0 %v568
        %608 = vmatprep.subr.mxu0 %v565
        %609 = vmatpush1.msra.mxu0 %v564
        %610 = vmatprep.subr.mxu0 %v561
        %611 = vmatpush1.msra.mxu0 %v560
        %612 = vmatprep.subr.mxu0 0.0
        %613 = vmatpush2.msra.mxu0 0.0
        %614 = vmatprep.subr.mxu0 0.0
        %615 = vmatpush2.msra.mxu0 0.0
        %616 = vmatprep.subr.mxu0 0.0
        %617 = vmatpush2.msra.mxu0 0.0
        %618 = vmatprep.subr.mxu0 0.0
        %619 = vmatpush2.msra.mxu0 0.0
        %620 = vmatprep.subr.mxu0 0.0
        %621 = vmatpush2.msra.mxu0 0.0
        %622 = vmatprep.subr.mxu0 0.0
        %623 = vmatpush2.msra.mxu0 0.0
        %624 = vmatprep.subr.mxu0 0.0
        %625 = vmatpush2.msra.mxu0 0.0
        %626 = vmatprep.subr.mxu0 0.0
        %627 = vmatpush2.msra.mxu0 0.0
        %628 = vmatprep.subr.mxu0 0.0
        %629 = vmatpush2.msra.mxu0 0.0
        %630 = vmatprep.subr.mxu0 0.0
        %631 = vmatpush2.msra.mxu0 0.0
        %632 = vmatprep.subr.mxu0 0.0
        %633 = vmatpush2.msra.mxu0 0.0
        %634 = vmatprep.subr.mxu0 0.0
        %635 = vmatpush2.msra.mxu0 0.0
        %636 = vmatprep.subr.mxu0 0.0
        %637 = vmatpush2.msra.mxu0 0.0
        %638 = vmatprep.subr.mxu0 0.0
        %639 = vmatpush2.msra.mxu0 0.0
        %640 = vmatprep.subr.mxu0 0.0
        %641 = vmatpush2.msra.mxu0 0.0
        %642 = vmatprep.subr.mxu0 0.0
        %643 = vmatpush2.msra.mxu0 0.0
        %644 = vmatprep.mubr.f32.mxu0 0.0
        %645 = vmatmul.mubr.f32.gmra.mxu0 %v578
        %v646 = vpop.f32.mrf.mxu0
        %v647 = vadd.f32 %v256, %v646
        %v648 = vpop.f32.mrf.mxu0
        %v649 = vadd.f32 %v256, %v648
        %650 = vdwg.mxu0
        %651 = vmatprep.subr.mxu0 0.0
        %652 = vmatpush1.msra.mxu0 0.0
        %653 = vmatprep.subr.mxu0 0.0
        %654 = vmatpush1.msra.mxu0 0.0
        %655 = vmatprep.subr.mxu0 0.0
        %656 = vmatpush1.msra.mxu0 0.0
        %657 = vmatprep.subr.mxu0 0.0
        %658 = vmatpush1.msra.mxu0 0.0
        %659 = vmatprep.subr.mxu0 0.0
        %660 = vmatpush1.msra.mxu0 0.0
        %661 = vmatprep.subr.mxu0 0.0
        %662 = vmatpush1.msra.mxu0 0.0
        %663 = vmatprep.subr.mxu0 0.0
        %664 = vmatpush1.msra.mxu0 0.0
        %665 = vmatprep.subr.mxu0 0.0
        %666 = vmatpush1.msra.mxu0 0.0
        %667 = vmatprep.subr.mxu0 0.0
        %668 = vmatpush1.msra.mxu0 0.0
        %669 = vmatprep.subr.mxu0 0.0
        %670 = vmatpush1.msra.mxu0 0.0
        %671 = vmatprep.subr.mxu0 0.0
        %672 = vmatpush1.msra.mxu0 0.0
        %673 = vmatprep.subr.mxu0 0.0
        %674 = vmatpush1.msra.mxu0 0.0
        %675 = vmatprep.subr.mxu0 %v575
        %676 = vmatpush1.msra.mxu0 %v574
        %677 = vmatprep.subr.mxu0 %v571
        %678 = vmatpush1.msra.mxu0 %v570
        %679 = vmatprep.subr.mxu0 %v567
        %680 = vmatpush1.msra.mxu0 %v566
        %681 = vmatprep.subr.mxu0 %v563
        %682 = vmatpush1.msra.mxu0 %v562
        %683 = vmatprep.subr.mxu0 0.0
        %684 = vmatpush2.msra.mxu0 0.0
        %685 = vmatprep.subr.mxu0 0.0
        %686 = vmatpush2.msra.mxu0 0.0
        %687 = vmatprep.subr.mxu0 0.0
        %688 = vmatpush2.msra.mxu0 0.0
        %689 = vmatprep.subr.mxu0 0.0
        %690 = vmatpush2.msra.mxu0 0.0
        %691 = vmatprep.subr.mxu0 0.0
        %692 = vmatpush2.msra.mxu0 0.0
        %693 = vmatprep.subr.mxu0 0.0
        %694 = vmatpush2.msra.mxu0 0.0
        %695 = vmatprep.subr.mxu0 0.0
        %696 = vmatpush2.msra.mxu0 0.0
        %697 = vmatprep.subr.mxu0 0.0
        %698 = vmatpush2.msra.mxu0 0.0
        %699 = vmatprep.subr.mxu0 0.0
        %700 = vmatpush2.msra.mxu0 0.0
        %701 = vmatprep.subr.mxu0 0.0
        %702 = vmatpush2.msra.mxu0 0.0
        %703 = vmatprep.subr.mxu0 0.0
        %704 = vmatpush2.msra.mxu0 0.0
        %705 = vmatprep.subr.mxu0 0.0
        %706 = vmatpush2.msra.mxu0 0.0
        %707 = vmatprep.subr.mxu0 0.0
        %708 = vmatpush2.msra.mxu0 0.0
        %709 = vmatprep.subr.mxu0 0.0
        %710 = vmatpush2.msra.mxu0 0.0
        %711 = vmatprep.subr.mxu0 0.0
        %712 = vmatpush2.msra.mxu0 0.0
        %713 = vmatprep.subr.mxu0 0.0
        %714 = vmatpush2.msra.mxu0 0.0
        %715 = vmatprep.mubr.f32.mxu0 0.0
        %716 = vmatmul.mubr.f32.gmra.mxu0 %v578
        %v717 = vpop.f32.mrf.mxu0
        %v718 = vadd.f32 %v256, %v717
        %v719 = vpop.f32.mrf.mxu0
        %v720 = vadd.f32 %v256, %v719
        %721 = vdwg.mxu0
        %v726 = vcombine.low %v647, %v649
        %v727 = vcombine.low %v718, %v720
        %v729 = vunpack.c.l.s4 1983009808
        %v730 = vunpack.c.0.s8 %v729
        %v731 = vlaneseq
        %v732 = vshrl.u32 %v731, 7
        %v733 = vsub.s32 %v730, %v732
        %v734 = vrot.slane %v726, %v733
        %v736 = vunpack.c.l.s4 1983009808
        %v737 = vunpack.c.0.s8 %v736
        %v738 = vlaneseq
        %v739 = vshrl.u32 %v738, 7
        %v740 = vsub.s32 %v737, %v739
        %v741 = vrot.slane %v727, %v740
        %v742 = vcombine.low %v734, %v741
        %744 = vst [vmem:[%s217] sm:$0xff] %v742
        %s745 = sand.u32 %s137, 1
        %s746 = scalar_lea.sflag [#allocation3], %s745
        %s747 = sand.u32 %s137, 1
        %s748 = smul.addr %s747, 8
        %s749 = scalar_lea.vmem [#allocation2], %s748
        // Predicated region
        $region41: #{tpu_custom_call.1} parent=39 // pred_check
          %p750 = pneg %p147
        $region42: #{tpu_custom_call.1} parent=39 // pred_check_branch
          %752 = sbr.rel (%p750) target = $region44
        $region43: #{tpu_custom_call.1} parent=39 // pred_region
          %s754 = ssub.s32 128, 128
          %755 = vsyncadd %s746, %s754
          %s756 = smul.addr %s19, 4
          %s757 = smul.addr %s756, 32
          %s758 = scalar_lea.hbm %s5, %s757
          %s760 = sshll.u32 %s749, 4
          %s761 = int_to_ptr.vmem [resolvable:$true] %s760
          %763 = dma.vmem_to_hbm [thread:$0]  %s761, 128, %s758, %s746
        $region44: #{tpu_custom_call.1} parent=39 // pred_fallthru
          _
      $region40: #{tpu_custom_call.1} parent=5 // pred_fallthru
        _
      %p764 = scmp.le.s32.totalorder 2, %s14
      // Predicated region
      $region45: #{tpu_custom_call.1} parent=5 // pred_check
        %p765 = pneg %p764
      $region46: #{tpu_custom_call.1} parent=5 // pred_check_branch
        %767 = sbr.rel (%p765) target = $region48
      $region47: #{tpu_custom_call.1} parent=5 // pred_region
        %s768 = ssub.s32 %s14, 2
        // Predicated region
        $region49: #{tpu_custom_call.1} parent=47 // pred_check
          %p769 = pneg %p153
        $region50: #{tpu_custom_call.1} parent=47 // pred_check_branch
          %771 = sbr.rel (%p769) target = $region52
        $region51: #{tpu_custom_call.1} parent=47 // pred_region
          %s772 = sand.u32 %s138, 1
          %s773 = scalar_lea.sflag [#allocation3], %s772
          %s774 = sand.u32 %s138, 1
          %s775 = smul.addr %s774, 8
          %s776 = scalar_lea.vmem [#allocation2], %s775
          %777 = dma.done %s773, 128
        $region52: #{tpu_custom_call.1} parent=47 // pred_fallthru
          _
      $region48: #{tpu_custom_call.1} parent=5 // pred_fallthru
        _
    $region6: #{tpu_custom_call.1} parent=1 // loop_footer
      %s18 = sadd.s32 1, %s14
    $region7: #{tpu_custom_call.1} parent=1 // loop_footer_branch
      %13 = sbr.rel target = $region3
    $region8: #{tpu_custom_call.1} parent=1 // loop_exit
      _
    %778 = vsyncpa [#allocation3], 1
    %s779 = scalar_lea.sflag [#allocation3], 1
    %780 = vsyncpa %s779, 1

</llo_original>
